<compile_context>
chip_gen: v7x
topology: tpu7x:2x2x1
jax: 0.10.0
libtpu: 0.0.40
codegen_flags: <defaults>
</compile_context>

<pallas_src>
import functools

import jax
import jax.numpy as jnp
from jax.experimental import pallas as pl
from jax.experimental.pallas import tpu as pltpu


def _round_up(x, m):
    return (x + m - 1) // m * m


def _critic_kernel(state_ref, action_ref,
                   w1_ref, b1_ref, w2_ref, b2_ref, w3_ref, b3_ref,
                   out_ref):
    # In-kernel cast to the MXU dtype (pallas input stays f32; one HBM pass).
    x = state_ref[...].astype(w1_ref.dtype)                        # [TB, S]

    # fc1 + relu (f32 accumulate / elementwise)
    h1 = jnp.dot(x, w1_ref[...], preferred_element_type=jnp.float32)
    h1 = jnp.maximum(h1 + b1_ref[...], 0.0)                        # [TB, 256]

    # fc2 + relu (hidden padded 64 -> 128 lanes; padded cols stay 0)
    h2 = jnp.dot(h1.astype(w2_ref.dtype), w2_ref[...],
                 preferred_element_type=jnp.float32)
    h2 = jnp.maximum(h2 + b2_ref[...], 0.0)                        # [TB, 128]

    # fc3 (logits; action_dim padded to 128 lanes, padded cols == 0)
    logits = jnp.dot(h2.astype(w3_ref.dtype), w3_ref[...],
                     preferred_element_type=jnp.float32)
    logits = logits + b3_ref[...]                                  # [TB, Apad]

    # gather(-1, action): per-k one-hot masked lane-reduce written straight
    # into its output row of the lane-dense [K, TB] slab (no concat / no full
    # q.T relayout).  Valid actions never touch the zero-padded columns.
    a = action_ref[...]                                            # [TB, K] i32
    tb, a_pad = logits.shape
    col = jax.lax.broadcasted_iota(jnp.int32, (tb, a_pad), 1)      # [TB, Apad]
    for k in range(a.shape[1]):                                    # K tiny/static
        sel = col == a[:, k:k + 1]
        qk = jnp.sum(jnp.where(sel, logits, 0.0),
                     axis=-1, keepdims=True)                       # [TB, 1]
        out_ref[k:k + 1, :] = qk.T                                 # [1, TB]


# h1 f32 at TB=2048 is 2 MiB; whole double-buffered working set < 5 MiB ->
# comfortably under the scoped-VMEM default on v5e/v6e/v7x.
_MAX_TILE_B = 2048


def _choose_tile_b(batch):
    """Small B: one exact full-dim block (no padding, no raggedness).
    B >= 256: >= 2 grid steps (v7x shards the 'parallel' axis over 2 TCs),
    tile a multiple of 128 so the output store stays an unmasked vst."""
    if batch < 256:
        return batch
    return min(_MAX_TILE_B, _round_up(pl.cdiv(batch, 2), 128))


def _prep_params(params, mxu_dtype):
    """Pad hidden-64 and action_dim to 128 lanes; cast weights for the MXU.
    Do NOT pad state_dim: it would multiply the dominant state DMA."""
    w1, b1, w2, b2, w3, b3 = params
    h2 = w2.shape[1]
    a_dim = w3.shape[1]
    h2p = _round_up(h2, 128)
    a_pad = _round_up(a_dim, 128)

    w2p = jnp.pad(w2, ((0, 0), (0, h2p - h2)))
    b2p = jnp.pad(b2, ((0, 0), (0, h2p - h2)))
    w3p = jnp.pad(w3, ((0, h2p - h2), (0, a_pad - a_dim)))
    b3p = jnp.pad(b3, ((0, 0), (0, a_pad - a_dim)))

    return (w1.astype(mxu_dtype), b1.astype(jnp.float32),
            w2p.astype(mxu_dtype), b2p.astype(jnp.float32),
            w3p.astype(mxu_dtype), b3p.astype(jnp.float32))


@functools.partial(jax.jit, static_argnames=("mxu_dtype",))
def critic_forward(state, action, params, *, mxu_dtype=jnp.bfloat16):
    """state: [B, state_dim] f32; action: [B, K] int32 -> qs [B, K] f32."""
    w1, b1, w2, b2, w3, b3 = _prep_params(params, mxu_dtype)
    B, S = state.shape
    K = action.shape[1]
    H1 = w1.shape[1]
    H2p = w2.shape[1]
    Ap = w3.shape[1]

    tile_b = _choose_tile_b(B)
    num_tiles = pl.cdiv(B, tile_b)
    b_pad = num_tiles * tile_b        # output allocation only; inputs are not
                                      # padded or copied in the wrapper.

    action = action.astype(jnp.int32)  # no-op when already int32

    itm = jnp.dtype(mxu_dtype).itemsize
    flops = 2 * b_pad * (S * H1 + H1 * H2p + H2p * Ap)
    bytes_accessed = (B * S * 4 + B * K * 4
                      + (S * H1 + H1 * H2p + H2p * Ap) * itm
                      + (H1 + H2p + Ap) * 4
                      + K * b_pad * 4)

    q_t = pl.pallas_call(
        _critic_kernel,
        out_shape=jax.ShapeDtypeStruct((K, b_pad), jnp.float32),
        grid=(num_tiles,),
        in_specs=[
            pl.BlockSpec((tile_b, S), lambda i: (i, 0)),    # state  (tiled, f32)
            pl.BlockSpec((tile_b, K), lambda i: (i, 0)),    # action (tiled)
            pl.BlockSpec((S, H1), lambda i: (0, 0)),        # w1 (VMEM resident)
            pl.BlockSpec((1, H1), lambda i: (0, 0)),        # b1
            pl.BlockSpec((H1, H2p), lambda i: (0, 0)),      # w2
            pl.BlockSpec((1, H2p), lambda i: (0, 0)),       # b2
            pl.BlockSpec((H2p, Ap), lambda i: (0, 0)),      # w3
            pl.BlockSpec((1, Ap), lambda i: (0, 0)),        # b3
        ],
        out_specs=pl.BlockSpec((K, tile_b), lambda i: (0, i)),
        compiler_params=pltpu.CompilerParams(
            dimension_semantics=("parallel",)),
        cost_estimate=pl.CostEstimate(
            flops=flops, transcendentals=0, bytes_accessed=bytes_accessed),
    )(state, action, w1, b1, w2, b2, w3, b3)

    return q_t[:, :B].T                                     # [B, K] f32


def init_params(key, state_dim, action_dim):
    """Deterministic synthetic parameters. Weights stored as [in, out]
    (PyTorch nn.Linear weight transposed); biases stored as [1, out]."""
    ks = jax.random.split(key, 6)

    def lin(kw, kb, fan_in, fan_out):
        bound = 1.0 / jnp.sqrt(fan_in)
        w = jax.random.uniform(kw, (fan_in, fan_out), jnp.float32, -bound, bound)
        b = jax.random.uniform(kb, (1, fan_out), jnp.float32, -bound, bound)
        return w, b

    w1, b1 = lin(ks[0], ks[1], state_dim, 256)
    w2, b2 = lin(ks[2], ks[3], 256, 64)
    w3, b3 = lin(ks[4], ks[5], 64, action_dim)
    return (w1, b1, w2, b2, w3, b3)


def critic_forward_ref(state, action, params):
    """Plain-JAX (f32) reference of the PyTorch forward."""
    w1, b1, w2, b2, w3, b3 = params
    x = jnp.maximum(state @ w1 + b1, 0.0)
    x = jnp.maximum(x @ w2 + b2, 0.0)
    logits = x @ w3 + b3
    return jnp.take_along_axis(logits, action, axis=-1)


if __name__ == "__main__":
    key = jax.random.PRNGKey(0)
    k_param, k_state, k_action = jax.random.split(key, 3)

    B, state_dim, action_dim = 8, 16, 8
    params = init_params(k_param, state_dim, action_dim)

    state = jax.random.normal(k_state, (B, state_dim), jnp.float32)
    action = jax.random.randint(k_action, (B, 1), 0, action_dim, jnp.int32)

    qs = critic_forward(state, action, params)
    qs = jax.block_until_ready(qs)

    qs_ref = critic_forward_ref(state, action, params)
    assert qs.shape == (B, 1), qs.shape
    # bf16 MXU operands with f32 accumulation -> relaxed tolerance vs f32 ref.
    assert jnp.allclose(qs, qs_ref, atol=5e-2, rtol=5e-2), (qs, qs_ref)

    print("KERNEL_OK")
</pallas_src>

<mosaic_0001>
module attributes {stable_mosaic.version = 11 : i64} {
  func.func @_critic_kernel(%arg0: i32, %arg1: memref<8x16xf32, #tpu.memory_space<vmem>>, %arg2: memref<8x1xi32, #tpu.memory_space<vmem>>, %arg3: memref<16x256xbf16, #tpu.memory_space<vmem>>, %arg4: memref<1x256xf32, #tpu.memory_space<vmem>>, %arg5: memref<256x128xbf16, #tpu.memory_space<vmem>>, %arg6: memref<1x128xf32, #tpu.memory_space<vmem>>, %arg7: memref<128x128xbf16, #tpu.memory_space<vmem>>, %arg8: memref<1x128xf32, #tpu.memory_space<vmem>>, %arg9: memref<1x8xf32, #tpu.memory_space<vmem>>) attributes {dimension_semantics = [#tpu.dimension_semantics<parallel>], iteration_bounds = array<i64: 1>, scalar_prefetch = 0 : i64, scratch_operands = 0 : i64, tpu.core_type = #tpu.core_type<tc>, window_params = [{transform_indices = @transform_0, window_bounds = array<i64: 8, 16>}, {transform_indices = @transform_1, window_bounds = array<i64: 8, 1>}, {pipeline_mode = #tpu.pipeline_mode<synchronous>, transform_indices = @transform_2, window_bounds = array<i64: 16, 256>}, {pipeline_mode = #tpu.pipeline_mode<synchronous>, transform_indices = @transform_3, window_bounds = array<i64: 1, 256>}, {pipeline_mode = #tpu.pipeline_mode<synchronous>, transform_indices = @transform_4, window_bounds = array<i64: 256, 128>}, {pipeline_mode = #tpu.pipeline_mode<synchronous>, transform_indices = @transform_5, window_bounds = array<i64: 1, 128>}, {pipeline_mode = #tpu.pipeline_mode<synchronous>, transform_indices = @transform_6, window_bounds = array<i64: 128, 128>}, {pipeline_mode = #tpu.pipeline_mode<synchronous>, transform_indices = @transform_7, window_bounds = array<i64: 1, 128>}, {transform_indices = @transform_8, window_bounds = array<i64: 1, 8>}]} {
    %c0 = arith.constant 0 : index
    %c0_0 = arith.constant 0 : index
    %0 = vector.load %arg1[%c0, %c0_0] : memref<8x16xf32, #tpu.memory_space<vmem>>, vector<8x16xf32>
    %1 = arith.truncf %0 : vector<8x16xf32> to vector<8x16xbf16>
    %c0_1 = arith.constant 0 : index
    %c0_2 = arith.constant 0 : index
    %2 = vector.load %arg3[%c0_1, %c0_2] : memref<16x256xbf16, #tpu.memory_space<vmem>>, vector<16x256xbf16>
    %cst = arith.constant dense<0.000000e+00> : vector<8x256xf32>
    %3 = tpu.matmul %1, %2, %cst {dimension_numbers = #tpu.dot_dimension_numbers<[1], [0], [0], [1], [0, 0, 1, 1], [], []>} : vector<8x16xbf16>, vector<16x256xbf16>, vector<8x256xf32> -> vector<8x256xf32>
    %c0_3 = arith.constant 0 : index
    %c0_4 = arith.constant 0 : index
    %4 = vector.load %arg4[%c0_3, %c0_4] : memref<1x256xf32, #tpu.memory_space<vmem>>, vector<1x256xf32>
    %5 = vector.broadcast %4 : vector<1x256xf32> to vector<8x256xf32>
    %6 = arith.addf %3, %5 : vector<8x256xf32>
    %cst_5 = arith.constant 0.000000e+00 : f32
    %7 = vector.broadcast %cst_5 : f32 to vector<8x256xf32>
    %8 = arith.maximumf %6, %7 : vector<8x256xf32>
    %9 = arith.truncf %8 : vector<8x256xf32> to vector<8x256xbf16>
    %c0_6 = arith.constant 0 : index
    %c0_7 = arith.constant 0 : index
    %10 = vector.load %arg5[%c0_6, %c0_7] : memref<256x128xbf16, #tpu.memory_space<vmem>>, vector<256x128xbf16>
    %cst_8 = arith.constant dense<0.000000e+00> : vector<8x128xf32>
    %11 = tpu.matmul %9, %10, %cst_8 {dimension_numbers = #tpu.dot_dimension_numbers<[1], [0], [0], [1], [0, 0, 1, 1], [], []>} : vector<8x256xbf16>, vector<256x128xbf16>, vector<8x128xf32> -> vector<8x128xf32>
    %c0_9 = arith.constant 0 : index
    %c0_10 = arith.constant 0 : index
    %12 = vector.load %arg6[%c0_9, %c0_10] : memref<1x128xf32, #tpu.memory_space<vmem>>, vector<1x128xf32>
    %13 = vector.broadcast %12 : vector<1x128xf32> to vector<8x128xf32>
    %14 = arith.addf %11, %13 : vector<8x128xf32>
    %cst_11 = arith.constant 0.000000e+00 : f32
    %15 = vector.broadcast %cst_11 : f32 to vector<8x128xf32>
    %16 = arith.maximumf %14, %15 : vector<8x128xf32>
    %17 = arith.truncf %16 : vector<8x128xf32> to vector<8x128xbf16>
    %c0_12 = arith.constant 0 : index
    %c0_13 = arith.constant 0 : index
    %18 = vector.load %arg7[%c0_12, %c0_13] : memref<128x128xbf16, #tpu.memory_space<vmem>>, vector<128x128xbf16>
    %cst_14 = arith.constant dense<0.000000e+00> : vector<8x128xf32>
    %19 = tpu.matmul %17, %18, %cst_14 {dimension_numbers = #tpu.dot_dimension_numbers<[1], [0], [0], [1], [0, 0, 1, 1], [], []>} : vector<8x128xbf16>, vector<128x128xbf16>, vector<8x128xf32> -> vector<8x128xf32>
    %c0_15 = arith.constant 0 : index
    %c0_16 = arith.constant 0 : index
    %20 = vector.load %arg8[%c0_15, %c0_16] : memref<1x128xf32, #tpu.memory_space<vmem>>, vector<1x128xf32>
    %21 = vector.broadcast %20 : vector<1x128xf32> to vector<8x128xf32>
    %22 = arith.addf %19, %21 : vector<8x128xf32>
    %c0_17 = arith.constant 0 : index
    %c0_18 = arith.constant 0 : index
    %23 = vector.load %arg2[%c0_17, %c0_18] : memref<8x1xi32, #tpu.memory_space<vmem>>, vector<8x1xi32>
    %24 = tpu.iota {dimensions = array<i32: 1>} : vector<8x128xi32>
    %25 = vector.broadcast %23 : vector<8x1xi32> to vector<8x128xi32>
    %26 = arith.cmpi eq, %24, %25 : vector<8x128xi32>
    %cst_19 = arith.constant 0.000000e+00 : f32
    %27 = vector.broadcast %cst_19 : f32 to vector<8x128xf32>
    %28 = arith.select %26, %22, %27 : vector<8x128xi1>, vector<8x128xf32>
    %cst_20 = arith.constant dense<0.000000e+00> : vector<8xf32>
    %29 = vector.multi_reduction <add>, %28, %cst_20 [1] : vector<8x128xf32> to vector<8xf32>
    %30 = vector.shape_cast %29 : vector<8xf32> to vector<8x1xf32>
    %31 = tpu.transpose %30, [1, 0] : vector<8x1xf32> -> vector<1x8xf32>
    %c0_21 = arith.constant 0 : index
    %c0_22 = arith.constant 0 : index
    %32 = vector.load %arg9[%c0_21, %c0_22] : memref<1x8xf32, #tpu.memory_space<vmem>>, vector<1x8xf32>
    tpu.vector_store %arg9[%c0_21, %c0_22], %31 {strides = array<i32>} : memref<1x8xf32, #tpu.memory_space<vmem>>, vector<1x8xf32>,
    return
  }
  func.func @transform_0(%arg0: i32) -> (i32, i32) {
    %c0_i32 = arith.constant 0 : i32
    %c0_i32_0 = arith.constant 0 : i32
    return %arg0, %c0_i32 : i32, i32
  }
  func.func @transform_1(%arg0: i32) -> (i32, i32) {
    %c0_i32 = arith.constant 0 : i32
    %c0_i32_0 = arith.constant 0 : i32
    return %arg0, %c0_i32 : i32, i32
  }
  func.func @transform_2(%arg0: i32) -> (i32, i32) {
    %c0_i32 = arith.constant 0 : i32
    %c0_i32_0 = arith.constant 0 : i32
    %c0_i32_1 = arith.constant 0 : i32
    return %c0_i32, %c0_i32_0 : i32, i32
  }
  func.func @transform_3(%arg0: i32) -> (i32, i32) {
    %c0_i32 = arith.constant 0 : i32
    %c0_i32_0 = arith.constant 0 : i32
    %c0_i32_1 = arith.constant 0 : i32
    return %c0_i32, %c0_i32_0 : i32, i32
  }
  func.func @transform_4(%arg0: i32) -> (i32, i32) {
    %c0_i32 = arith.constant 0 : i32
    %c0_i32_0 = arith.constant 0 : i32
    %c0_i32_1 = arith.constant 0 : i32
    return %c0_i32, %c0_i32_0 : i32, i32
  }
  func.func @transform_5(%arg0: i32) -> (i32, i32) {
    %c0_i32 = arith.constant 0 : i32
    %c0_i32_0 = arith.constant 0 : i32
    %c0_i32_1 = arith.constant 0 : i32
    return %c0_i32, %c0_i32_0 : i32, i32
  }
  func.func @transform_6(%arg0: i32) -> (i32, i32) {
    %c0_i32 = arith.constant 0 : i32
    %c0_i32_0 = arith.constant 0 : i32
    %c0_i32_1 = arith.constant 0 : i32
    return %c0_i32, %c0_i32_0 : i32, i32
  }
  func.func @transform_7(%arg0: i32) -> (i32, i32) {
    %c0_i32 = arith.constant 0 : i32
    %c0_i32_0 = arith.constant 0 : i32
    %c0_i32_1 = arith.constant 0 : i32
    return %c0_i32, %c0_i32_0 : i32, i32
  }
  func.func @transform_8(%arg0: i32) -> (i32, i32) {
    %c0_i32 = arith.constant 0 : i32
    %c0_i32_0 = arith.constant 0 : i32
    return %c0_i32, %arg0 : i32, i32
  }
}

</mosaic_0001>

<llo_original>
// kernel: critic_forward.1
$region0: #{critic_forward.1}
  #allocation0 [shape = 'u32[]', space=smem, size = 0x4, offset = 0x4, fixed_abs, tag = 'smem constant byte address 0x4 - core index']
  #allocation1 [shape = 'u32[144,128]{1,0:T(1,128)}', space=vmem, size = 0x12000, scoped, tag = 'internal scratch']
  %s0 = inlined_call_operand.vmem [shape: f32[8,16], index: 0, kind: input, shape index: {}]
  %s1 = inlined_call_operand.vmem [shape: s32[8,1], index: 1, kind: input, shape index: {}]
  %s2 = inlined_call_operand.vmem [shape: bf16[16,256], index: 2, kind: input, shape index: {}]
  %s3 = inlined_call_operand.vmem [shape: f32[1,256], index: 3, kind: input, shape index: {}]
  %s4 = inlined_call_operand.vmem [shape: bf16[256,128], index: 4, kind: input, shape index: {}]
  %s5 = inlined_call_operand.vmem [shape: f32[1,128], index: 5, kind: input, shape index: {}]
  %s6 = inlined_call_operand.vmem [shape: bf16[128,128], index: 6, kind: input, shape index: {}]
  %s7 = inlined_call_operand.vmem [shape: f32[1,128], index: 7, kind: input, shape index: {}]
  %s8 = inlined_call_operand.hbm [shape: f32[1,8], index: 8, kind: output, shape index: {}]
  %s9 = sld [smem:[#allocation0]]
  $region42: #{critic_forward.1} parent=0
    _
  %s11 = ssub.s32 1, %s9
  %s12 = scalar_select 0, %s11, %s9
  $region1: #{critic_forward.1} parent=0
    #allocation2 [shape = 'u8[512]{0}', space=vmem, size = 0x400, scoped, tag = 'output window, operand 0, single buffered']
    #allocation3 [shape = 's32[1]{0}', space=sflag, size = 0x4, scoped, tag = 'scoped memory for critic_forward.1']
    %13 = vsyncpa [#allocation3], 0
    // Predicated region
    $region2: #{critic_forward.1} parent=1 // pred_check
      _
    $region3: #{critic_forward.1} parent=1 // pred_check_branch
      %15 = sbr.rel (0) target = $region5
    $region4: #{critic_forward.1} parent=1 // pred_region
      _
    $region5: #{critic_forward.1} parent=1 // pred_fallthru
      _
    // Predicated region
    $region6: #{critic_forward.1} parent=1 // pred_check
      _
    $region7: #{critic_forward.1} parent=1 // pred_check_branch
      %17 = sbr.rel (0) target = $region9
    $region8: #{critic_forward.1} parent=1 // pred_region
      _
    $region9: #{critic_forward.1} parent=1 // pred_fallthru
      _
    // Predicated region
    $region10: #{critic_forward.1} parent=1 // pred_check
      _
    $region11: #{critic_forward.1} parent=1 // pred_check_branch
      %19 = sbr.rel (0) target = $region13
    $region12: #{critic_forward.1} parent=1 // pred_region
      _
    $region13: #{critic_forward.1} parent=1 // pred_fallthru
      _
    // Predicated region
    $region14: #{critic_forward.1} parent=1 // pred_check
      _
    $region15: #{critic_forward.1} parent=1 // pred_check_branch
      %21 = sbr.rel (0) target = $region17
    $region16: #{critic_forward.1} parent=1 // pred_region
      _
    $region17: #{critic_forward.1} parent=1 // pred_fallthru
      _
    // Predicated region
    $region18: #{critic_forward.1} parent=1 // pred_check
      _
    $region19: #{critic_forward.1} parent=1 // pred_check_branch
      %23 = sbr.rel (0) target = $region21
    $region20: #{critic_forward.1} parent=1 // pred_region
      _
    $region21: #{critic_forward.1} parent=1 // pred_fallthru
      _
    // Predicated region
    $region22: #{critic_forward.1} parent=1 // pred_check
      _
    $region23: #{critic_forward.1} parent=1 // pred_check_branch
      %25 = sbr.rel (0) target = $region25
    $region24: #{critic_forward.1} parent=1 // pred_region
      _
    $region25: #{critic_forward.1} parent=1 // pred_fallthru
      _
    // Predicated region
    $region26: #{critic_forward.1} parent=1 // pred_check
      _
    $region27: #{critic_forward.1} parent=1 // pred_check_branch
      %27 = sbr.rel (0) target = $region29
    $region28: #{critic_forward.1} parent=1 // pred_region
      _
    $region29: #{critic_forward.1} parent=1 // pred_fallthru
      _
    // Predicated region
    $region30: #{critic_forward.1} parent=1 // pred_check
      _
    $region31: #{critic_forward.1} parent=1 // pred_check_branch
      %29 = sbr.rel (0) target = $region33
    $region32: #{critic_forward.1} parent=1 // pred_region
      _
    $region33: #{critic_forward.1} parent=1 // pred_fallthru
      _
    %v31 = vld [vmem:[%s0] sm:$0xff]
    %v32 = vpack.c.bf16 %v31, %v31
    %v33 = vld [vmem:[%s2] sm:$0xff]
    %v34 = vld [vmem:[%s2 + $0x8] sm:$0xff]
    %v35 = vld [vmem:[%s3] sm:$0x3]
    %v37 = vlaneseq
    %v38 = vshrl.u32 %v37, 7
    %v39 = vsub.s32 0, %v38
    %v40 = vrot.slane %v35, %v39
    %v41 = vlaneseq
    %v42 = vshrl.u32 %v41, 7
    %v43 = vsub.s32 1, %v42
    %v44 = vrot.slane %v35, %v43
    %v49 = vunpack.c.l.b16 %v33
    %v50 = vunpack.c.h.b16 %v33
    %v51 = vunpack.c.l.b16 %v34
    %v52 = vunpack.c.h.b16 %v34
    %v53 = vpack.c.b16 %v51, %v49
    %v54 = vpack.c.b16 %v52, %v50
    %vm57 = vcmask 130048
    %v59 = vsel %vm57, %v32, 0
    %61 = vmatprep.subr.bf16.mxu0 %v54
    %62 = vmatpush1.bf16.msra.mxu0 %v53
    %63 = vmatprep.subr.bf16.mxu0 0
    %64 = vmatpush1.bf16.msra.mxu0 0
    %65 = vmatprep.subr.bf16.mxu0 0
    %66 = vmatpush1.bf16.msra.mxu0 0
    %67 = vmatprep.subr.bf16.mxu0 0
    %68 = vmatpush1.bf16.msra.mxu0 0
    %69 = vmatprep.subr.bf16.mxu0 0
    %70 = vmatpush1.bf16.msra.mxu0 0
    %71 = vmatprep.subr.bf16.mxu0 0
    %72 = vmatpush1.bf16.msra.mxu0 0
    %73 = vmatprep.subr.bf16.mxu0 0
    %74 = vmatpush1.bf16.msra.mxu0 0
    %75 = vmatprep.subr.bf16.mxu0 0
    %76 = vmatpush1.bf16.msra.mxu0 0
    %77 = vmatprep.subr.bf16.mxu0 0
    %78 = vmatpush1.bf16.msra.mxu0 0
    %79 = vmatprep.subr.bf16.mxu0 0
    %80 = vmatpush1.bf16.msra.mxu0 0
    %81 = vmatprep.subr.bf16.mxu0 0
    %82 = vmatpush1.bf16.msra.mxu0 0
    %83 = vmatprep.subr.bf16.mxu0 0
    %84 = vmatpush1.bf16.msra.mxu0 0
    %85 = vmatprep.subr.bf16.mxu0 0
    %86 = vmatpush1.bf16.msra.mxu0 0
    %87 = vmatprep.subr.bf16.mxu0 0
    %88 = vmatpush1.bf16.msra.mxu0 0
    %89 = vmatprep.subr.bf16.mxu0 0
    %90 = vmatpush1.bf16.msra.mxu0 0
    %91 = vmatprep.subr.bf16.mxu0 0
    %92 = vmatpush1.bf16.msra.mxu0 0
    %93 = vmatprep.mubr.bf16.mxu0 0
    %94 = vmatmul.mubr.bf16.gmra.mrb[0].mxu0 %v59
    %v95 = vpop.f32.mrb[0].mxu0
    %v96 = vadd.f32 %v40, %v95
    %v97 = vpop.f32.mrb[0].mxu0
    %v98 = vadd.f32 %v44, %v97
    %v99 = vpop.f32.mrb[0].mxu0
    %v100 = vpop.f32.mrb[0].mxu0
    %101 = vdwg.mxu0
    %v102 = vmax.f32 %v96, 0.0
    %v103 = vmax.f32 %v98, 0.0
    %v104 = vpack.c.bf16 %v102, %v102
    %v105 = vpack.c.bf16 %v103, %v103
    %v106 = vld [vmem:[%s4] sm:$0xf]
    %v107 = vld [vmem:[%s4 + $0x4] sm:$0xf]
    %v108 = vld [vmem:[%s4 + $0x8] sm:$0xf]
    %v109 = vld [vmem:[%s4 + $0xc] sm:$0xf]
    %v110 = vld [vmem:[%s4 + $0x10] sm:$0xf]
    %v111 = vld [vmem:[%s4 + $0x14] sm:$0xf]
    %v112 = vld [vmem:[%s4 + $0x18] sm:$0xf]
    %v113 = vld [vmem:[%s4 + $0x1c] sm:$0xf]
    %v114 = vld [vmem:[%s4 + $0x20] sm:$0xf]
    %v115 = vld [vmem:[%s4 + $0x24] sm:$0xf]
    %v116 = vld [vmem:[%s4 + $0x28] sm:$0xf]
    %v117 = vld [vmem:[%s4 + $0x2c] sm:$0xf]
    %v118 = vld [vmem:[%s4 + $0x30] sm:$0xf]
    %v119 = vld [vmem:[%s4 + $0x34] sm:$0xf]
    %v120 = vld [vmem:[%s4 + $0x38] sm:$0xf]
    %v121 = vld [vmem:[%s4 + $0x3c] sm:$0xf]
    %v122 = vld [vmem:[%s4 + $0x40] sm:$0xf]
    %v123 = vld [vmem:[%s4 + $0x44] sm:$0xf]
    %v124 = vld [vmem:[%s4 + $0x48] sm:$0xf]
    %v125 = vld [vmem:[%s4 + $0x4c] sm:$0xf]
    %v126 = vld [vmem:[%s4 + $0x50] sm:$0xf]
    %v127 = vld [vmem:[%s4 + $0x54] sm:$0xf]
    %v128 = vld [vmem:[%s4 + $0x58] sm:$0xf]
    %v129 = vld [vmem:[%s4 + $0x5c] sm:$0xf]
    %v130 = vld [vmem:[%s4 + $0x60] sm:$0xf]
    %v131 = vld [vmem:[%s4 + $0x64] sm:$0xf]
    %v132 = vld [vmem:[%s4 + $0x68] sm:$0xf]
    %v133 = vld [vmem:[%s4 + $0x6c] sm:$0xf]
    %v134 = vld [vmem:[%s4 + $0x70] sm:$0xf]
    %v135 = vld [vmem:[%s4 + $0x74] sm:$0xf]
    %v136 = vld [vmem:[%s4 + $0x78] sm:$0xf]
    %v137 = vld [vmem:[%s4 + $0x7c] sm:$0xf]
    %v138 = vld [vmem:[%s5] sm:$0x1]
    %v140 = vlaneseq
    %v141 = vshrl.u32 %v140, 7
    %v142 = vsub.s32 0, %v141
    %v143 = vrot.slane %v138, %v142
    %v177 = vunpack.c.l.b16 %v106
    %v178 = vunpack.c.l.b16 %v107
    %v179 = vunpack.c.l.b16 %v108
    %v180 = vunpack.c.l.b16 %v109
    %v181 = vunpack.c.l.b16 %v110
    %v182 = vunpack.c.l.b16 %v111
    %v183 = vunpack.c.l.b16 %v112
    %v184 = vunpack.c.l.b16 %v113
    %v185 = vunpack.c.l.b16 %v114
    %v186 = vunpack.c.l.b16 %v115
    %v187 = vunpack.c.l.b16 %v116
    %v188 = vunpack.c.l.b16 %v117
    %v189 = vunpack.c.l.b16 %v118
    %v190 = vunpack.c.l.b16 %v119
    %v191 = vunpack.c.l.b16 %v120
    %v192 = vunpack.c.l.b16 %v121
    %v193 = vunpack.c.l.b16 %v122
    %v194 = vunpack.c.l.b16 %v123
    %v195 = vunpack.c.l.b16 %v124
    %v196 = vunpack.c.l.b16 %v125
    %v197 = vunpack.c.l.b16 %v126
    %v198 = vunpack.c.l.b16 %v127
    %v199 = vunpack.c.l.b16 %v128
    %v200 = vunpack.c.l.b16 %v129
    %v201 = vunpack.c.l.b16 %v130
    %v202 = vunpack.c.l.b16 %v131
    %v203 = vunpack.c.l.b16 %v132
    %v204 = vunpack.c.l.b16 %v133
    %v205 = vunpack.c.l.b16 %v134
    %v206 = vunpack.c.l.b16 %v135
    %v207 = vunpack.c.l.b16 %v136
    %v208 = vunpack.c.l.b16 %v137
    %v209 = vpack.c.b16 %v178, %v177
    %v210 = vpack.c.b16 %v180, %v179
    %v211 = vpack.c.b16 %v182, %v181
    %v212 = vpack.c.b16 %v184, %v183
    %v213 = vpack.c.b16 %v186, %v185
    %v214 = vpack.c.b16 %v188, %v187
    %v215 = vpack.c.b16 %v190, %v189
    %v216 = vpack.c.b16 %v192, %v191
    %v217 = vpack.c.b16 %v194, %v193
    %v218 = vpack.c.b16 %v196, %v195
    %v219 = vpack.c.b16 %v198, %v197
    %v220 = vpack.c.b16 %v200, %v199
    %v221 = vpack.c.b16 %v202, %v201
    %v222 = vpack.c.b16 %v204, %v203
    %v223 = vpack.c.b16 %v206, %v205
    %v224 = vpack.c.b16 %v208, %v207
    %241 = vmatprep.subr.bf16.mxu0 0
    %242 = vmatpush1.bf16.msra.mxu0 %v209
    %243 = vmatprep.subr.bf16.mxu0 0
    %244 = vmatpush1.bf16.msra.mxu0 %v210
    %245 = vmatprep.subr.bf16.mxu0 0
    %246 = vmatpush1.bf16.msra.mxu0 %v211
    %247 = vmatprep.subr.bf16.mxu0 0
    %248 = vmatpush1.bf16.msra.mxu0 %v212
    %249 = vmatprep.subr.bf16.mxu0 0
    %250 = vmatpush1.bf16.msra.mxu0 %v213
    %251 = vmatprep.subr.bf16.mxu0 0
    %252 = vmatpush1.bf16.msra.mxu0 %v214
    %253 = vmatprep.subr.bf16.mxu0 0
    %254 = vmatpush1.bf16.msra.mxu0 %v215
    %255 = vmatprep.subr.bf16.mxu0 0
    %256 = vmatpush1.bf16.msra.mxu0 %v216
    %257 = vmatprep.subr.bf16.mxu0 0
    %258 = vmatpush1.bf16.msra.mxu0 %v217
    %259 = vmatprep.subr.bf16.mxu0 0
    %260 = vmatpush1.bf16.msra.mxu0 %v218
    %261 = vmatprep.subr.bf16.mxu0 0
    %262 = vmatpush1.bf16.msra.mxu0 %v219
    %263 = vmatprep.subr.bf16.mxu0 0
    %264 = vmatpush1.bf16.msra.mxu0 %v220
    %265 = vmatprep.subr.bf16.mxu0 0
    %266 = vmatpush1.bf16.msra.mxu0 %v221
    %267 = vmatprep.subr.bf16.mxu0 0
    %268 = vmatpush1.bf16.msra.mxu0 %v222
    %269 = vmatprep.subr.bf16.mxu0 0
    %270 = vmatpush1.bf16.msra.mxu0 %v223
    %271 = vmatprep.subr.bf16.mxu0 0
    %272 = vmatpush1.bf16.msra.mxu0 %v224
    %273 = vmatprep.mubr.bf16.mxu0 %v105
    %274 = vmatmul.mubr.bf16.gmra.mrb[0].mxu0 %v104
    %v275 = vpop.f32.mrb[0].mxu0
    %v276 = vadd.f32 %v143, %v275
    %v277 = vpop.f32.mrb[0].mxu0
    %v278 = vpop.f32.mrb[0].mxu0
    %v279 = vpop.f32.mrb[0].mxu0
    %280 = vdwg.mxu0
    %v281 = vmax.f32 %v276, 0.0
    %v282 = vpack.c.bf16 %v281, %v281
    %v283 = vld [vmem:[%s6] sm:$0xf]
    %v284 = vld [vmem:[%s6 + $0x4] sm:$0xf]
    %v285 = vld [vmem:[%s6 + $0x8] sm:$0xf]
    %v286 = vld [vmem:[%s6 + $0xc] sm:$0xf]
    %v287 = vld [vmem:[%s6 + $0x10] sm:$0xf]
    %v288 = vld [vmem:[%s6 + $0x14] sm:$0xf]
    %v289 = vld [vmem:[%s6 + $0x18] sm:$0xf]
    %v290 = vld [vmem:[%s6 + $0x1c] sm:$0xf]
    %v291 = vld [vmem:[%s6 + $0x20] sm:$0xf]
    %v292 = vld [vmem:[%s6 + $0x24] sm:$0xf]
    %v293 = vld [vmem:[%s6 + $0x28] sm:$0xf]
    %v294 = vld [vmem:[%s6 + $0x2c] sm:$0xf]
    %v295 = vld [vmem:[%s6 + $0x30] sm:$0xf]
    %v296 = vld [vmem:[%s6 + $0x34] sm:$0xf]
    %v297 = vld [vmem:[%s6 + $0x38] sm:$0xf]
    %v298 = vld [vmem:[%s6 + $0x3c] sm:$0xf]
    %v299 = vld [vmem:[%s7] sm:$0x1]
    %v301 = vlaneseq
    %v302 = vshrl.u32 %v301, 7
    %v303 = vsub.s32 0, %v302
    %v304 = vrot.slane %v299, %v303
    %v322 = vunpack.c.l.b16 %v283
    %v323 = vunpack.c.l.b16 %v284
    %v324 = vunpack.c.l.b16 %v285
    %v325 = vunpack.c.l.b16 %v286
    %v326 = vunpack.c.l.b16 %v287
    %v327 = vunpack.c.l.b16 %v288
    %v328 = vunpack.c.l.b16 %v289
    %v329 = vunpack.c.l.b16 %v290
    %v330 = vunpack.c.l.b16 %v291
    %v331 = vunpack.c.l.b16 %v292
    %v332 = vunpack.c.l.b16 %v293
    %v333 = vunpack.c.l.b16 %v294
    %v334 = vunpack.c.l.b16 %v295
    %v335 = vunpack.c.l.b16 %v296
    %v336 = vunpack.c.l.b16 %v297
    %v337 = vunpack.c.l.b16 %v298
    %v338 = vpack.c.b16 %v323, %v322
    %v339 = vpack.c.b16 %v325, %v324
    %v340 = vpack.c.b16 %v327, %v326
    %v341 = vpack.c.b16 %v329, %v328
    %v342 = vpack.c.b16 %v331, %v330
    %v343 = vpack.c.b16 %v333, %v332
    %v344 = vpack.c.b16 %v335, %v334
    %v345 = vpack.c.b16 %v337, %v336
    %354 = vmatprep.subr.bf16.mxu0 0
    %355 = vmatpush1.bf16.msra.mxu0 %v338
    %356 = vmatprep.subr.bf16.mxu0 0
    %357 = vmatpush1.bf16.msra.mxu0 %v339
    %358 = vmatprep.subr.bf16.mxu0 0
    %359 = vmatpush1.bf16.msra.mxu0 %v340
    %360 = vmatprep.subr.bf16.mxu0 0
    %361 = vmatpush1.bf16.msra.mxu0 %v341
    %362 = vmatprep.subr.bf16.mxu0 0
    %363 = vmatpush1.bf16.msra.mxu0 %v342
    %364 = vmatprep.subr.bf16.mxu0 0
    %365 = vmatpush1.bf16.msra.mxu0 %v343
    %366 = vmatprep.subr.bf16.mxu0 0
    %367 = vmatpush1.bf16.msra.mxu0 %v344
    %368 = vmatprep.subr.bf16.mxu0 0
    %369 = vmatpush1.bf16.msra.mxu0 %v345
    %370 = vmatprep.subr.bf16.mxu0 0
    %371 = vmatpush1.bf16.msra.mxu0 0
    %372 = vmatprep.subr.bf16.mxu0 0
    %373 = vmatpush1.bf16.msra.mxu0 0
    %374 = vmatprep.subr.bf16.mxu0 0
    %375 = vmatpush1.bf16.msra.mxu0 0
    %376 = vmatprep.subr.bf16.mxu0 0
    %377 = vmatpush1.bf16.msra.mxu0 0
    %378 = vmatprep.subr.bf16.mxu0 0
    %379 = vmatpush1.bf16.msra.mxu0 0
    %380 = vmatprep.subr.bf16.mxu0 0
    %381 = vmatpush1.bf16.msra.mxu0 0
    %382 = vmatprep.subr.bf16.mxu0 0
    %383 = vmatpush1.bf16.msra.mxu0 0
    %384 = vmatprep.subr.bf16.mxu0 0
    %385 = vmatpush1.bf16.msra.mxu0 0
    %386 = vmatprep.mubr.bf16.mxu0 0
    %387 = vmatmul.mubr.bf16.gmra.mrb[0].mxu0 %v282
    %v388 = vpop.f32.mrb[0].mxu0
    %v389 = vadd.f32 %v304, %v388
    %v390 = vpop.f32.mrb[0].mxu0
    %v391 = vpop.f32.mrb[0].mxu0
    %v392 = vpop.f32.mrb[0].mxu0
    %393 = vdwg.mxu0
    %v394 = vld [vmem:[%s1] sm:$0xff]
    %v395 = vlaneseq
    %v396 = vand.u32 %v395, 127
    %397 = vset.pattern.permute.xlu0 0
    %398 = vperm.xlu0 %397, %v394
    %v399 = vpop.permute.xlu0 %398
    %vm400 = vcmp.eq.s32.totalorder %v396, %v399
    %v401 = vsel %vm400, %v389, 0.0
    %402 = vadd.xlane.f32.xlu0 %v401
    %v403 = vpop.xlane.xlu0 %402
    %404 = vxpose.xlu0.b32.start [1/16] %v403, 128
    %405 = vxpose.xlu0.b32.cont [2/16] 0.0, 128
    %406 = vxpose.xlu0.b32.cont [3/16] 0.0, 128
    %407 = vxpose.xlu0.b32.cont [4/16] 0.0, 128
    %408 = vxpose.xlu0.b32.cont [5/16] 0.0, 128
    %409 = vxpose.xlu0.b32.cont [6/16] 0.0, 128
    %410 = vxpose.xlu0.b32.cont [7/16] 0.0, 128
    %411 = vxpose.xlu0.b32.cont [8/16] 0.0, 128
    %412 = vxpose.xlu0.b32.cont [9/16] 0.0, 128
    %413 = vxpose.xlu0.b32.cont [10/16] 0.0, 128
    %414 = vxpose.xlu0.b32.cont [11/16] 0.0, 128
    %415 = vxpose.xlu0.b32.cont [12/16] 0.0, 128
    %416 = vxpose.xlu0.b32.cont [13/16] 0.0, 128
    %417 = vxpose.xlu0.b32.cont [14/16] 0.0, 128
    %418 = vxpose.xlu0.b32.cont [15/16] 0.0, 128
    %419 = vxpose.xlu0.b32.end [16/16] 0.0, 128
    %v420 = vpop.trf.xlu0
    %v421 = vpop.trf.xlu0
    %v422 = vpop.trf.xlu0
    %v423 = vpop.trf.xlu0
    %v424 = vpop.trf.xlu0
    %v425 = vpop.trf.xlu0
    %v426 = vpop.trf.xlu0
    %v427 = vpop.trf.xlu0
    %v428 = vpop.trf.xlu0
    %v429 = vpop.trf.xlu0
    %v430 = vpop.trf.xlu0
    %v431 = vpop.trf.xlu0
    %v432 = vpop.trf.xlu0
    %v433 = vpop.trf.xlu0
    %v434 = vpop.trf.xlu0
    %v435 = vpop.trf.xlu0
    %vm436 = vcmask 57344
    %437 = vst.msk [vmem:[#allocation2] sm:$0x1] %vm436, %v420
    // Predicated region
    $region34: #{critic_forward.1} parent=1 // pred_check
      _
    $region35: #{critic_forward.1} parent=1 // pred_check_branch
      %439 = sbr.rel (0) target = $region37
    $region36: #{critic_forward.1} parent=1 // pred_region
      %s441 = ssub.s32 16, 16
      %442 = vsyncadd [#allocation3], %s441
      %s444 = sshll.u32 [#allocation2], 4
      %s445 = int_to_ptr.vmem [resolvable:$true] %s444
      %447 = dma.vmem_to_hbm [thread:$0]  %s445, 16, %s8, [#allocation3]
    $region37: #{critic_forward.1} parent=1 // pred_fallthru
      _
    // Predicated region
    $region38: #{critic_forward.1} parent=1 // pred_check
      _
    $region39: #{critic_forward.1} parent=1 // pred_check_branch
      %449 = sbr.rel (0) target = $region41
    $region40: #{critic_forward.1} parent=1 // pred_region
      %450 = dma.done [#allocation3], 16
    $region41: #{critic_forward.1} parent=1 // pred_fallthru
      _
    %451 = vsyncpa [#allocation3], 1

</llo_original>
